<compile_context>
chip_gen: v7x
topology: tpu7x:2x2x1
jax: 0.10.0
libtpu: 0.0.40
codegen_flags: <defaults>
</compile_context>

<pallas_src>
import functools

import jax
import jax.numpy as jnp
from jax.experimental import pallas as pl
from jax.experimental.pallas import tpu as pltpu


def _round_up(n, m):
    return ((n + m - 1) // m) * m


def _att_block_kernel(x_ref, w_ref, b_ref, out_ref, natt_ref, cla_ref, *,
                      activation, out_features, o_pad, mxu_dtype):
    # x_ref:    (Bt, C, T)        Bt batch elements (time on lanes)
    # w_ref:    (2*OP, C)         stacked [att; cla] 1x1-conv weights
    # b_ref:    (2*OP, 1)         stacked biases
    # out_ref:  (Bt, O, 1)        pooled output (O on sublanes -> no relayout)
    # natt_ref: (Bt, O, T)        softmax(tanh(att(x)))
    # cla_ref:  (Bt, O, T)        nonlinear(cla(x))
    O, OP = out_features, o_pad
    bt = x_ref.shape[0]

    w = w_ref[...]                                  # grid-invariant weights
    bias = b_ref[...].astype(jnp.float32)           # (2*OP, 1)

    # Static (unrolled) loop over the Bt batch elements in this block; each
    # iteration is a single fused MXU matmul covering BOTH branches.
    for b in range(bt):
        xb = x_ref[b]                               # (C, T)
        if mxu_dtype is not None:
            xb = xb.astype(mxu_dtype)               # bf16 MXU inputs (v6e/v7x)
        z = jnp.dot(w, xb, preferred_element_type=jnp.float32) + bias  # (2*OP, T)

        att = jnp.tanh(z[:OP, :])                   # attention branch
        cla = z[OP:, :]                             # classification branch
        if activation == "sigmoid":
            cla = jax.nn.sigmoid(cla)
        # activation == "linear": identity

        # Numerically stable softmax over time (lane dim); approx reciprocal
        # goes to the EUP slot essentially for free.
        m = jnp.max(att, axis=-1, keepdims=True)
        p = jnp.exp(att - m)
        norm_att = p * pl.reciprocal(jnp.sum(p, axis=-1, keepdims=True),
                                     approx=True)   # (OP, T)

        pooled = jnp.sum(norm_att * cla, axis=-1, keepdims=True)       # (OP, 1)

        natt_ref[b] = norm_att[:O].astype(natt_ref.dtype)
        cla_ref[b] = cla[:O].astype(cla_ref.dtype)
        out_ref[b] = pooled[:O].astype(out_ref.dtype)


def _pick_batch_block(B, C, T, o_pad, itemsize, vmem_budget=8 * 1024 * 1024):
    """Largest divisor of B that (a) keeps the grid >= 2 when B >= 2 (so both
    v7x TensorCores / megacore axes stay busy) and (b) keeps the double-buffered
    per-step block well inside VMEM."""
    per_elem = itemsize * (C * T + 2 * o_pad * T + o_pad)
    max_bt = max(1, vmem_budget // max(1, 2 * per_elem))
    best = 1
    for d in range(1, B + 1):
        if B % d:
            continue
        if d > max_bt:
            continue
        if B >= 2 and B // d < 2:
            continue
        best = d
    return best


def _vmem_limit_bytes(bt, C, T, O, o_pad, itemsize):
    x_blk = bt * C * T * itemsize
    out_blk = bt * (2 * O * T + O) * itemsize
    w_blk = 2 * o_pad * (C + 1) * itemsize
    need = 2 * (x_blk + out_blk) + 2 * w_blk        # double-buffered blocks
    need = int(1.5 * need) + (4 << 20)              # compiler scratch slack
    return max(32 << 20, min(need, 56 << 20))       # stay under v7x's 64 MiB


def att_block_v2(x, w_att, b_att, w_cla, b_cla, activation="linear", *,
                 batch_block=None, mxu_dtype=None):
    """Pallas implementation of AttBlockV2.forward.

    Args:
      x:      (B, C_in, T) float32
      w_att:  (C_out, C_in) squeezed kernel_size=1 conv weight
      b_att:  (C_out,)
      w_cla:  (C_out, C_in)
      b_cla:  (C_out,)
      mxu_dtype: optional dtype (e.g. jnp.bfloat16) for MXU inputs on v6e/v7x.
    Returns: (pooled (B, C_out), norm_att (B, C_out, T), cla (B, C_out, T))
    """
    if activation not in ("linear", "sigmoid"):
        raise ValueError(f"unsupported activation: {activation}")
    B, C, T = x.shape
    O = w_att.shape[0]
    dt = x.dtype
    OP = _round_up(O, 8)  # sublane-aligned split point inside the stacked matmul

    # Stack both 1x1-conv weights/biases -> a single matmul in the kernel.
    w_dtype = mxu_dtype if mxu_dtype is not None else dt
    w_stack = jnp.zeros((2 * OP, C), w_dtype)
    w_stack = w_stack.at[:O].set(w_att.astype(w_dtype))
    w_stack = w_stack.at[OP:OP + O].set(w_cla.astype(w_dtype))
    b_stack = jnp.zeros((2 * OP, 1), jnp.float32)
    b_stack = b_stack.at[:O, 0].set(b_att.astype(jnp.float32))
    b_stack = b_stack.at[OP:OP + O, 0].set(b_cla.astype(jnp.float32))

    itemsize = jnp.dtype(dt).itemsize
    bt = batch_block if batch_block is not None else _pick_batch_block(
        B, C, T, OP, itemsize)
    if B % bt != 0:
        raise ValueError(f"batch_block={bt} must divide batch={B}")
    grid = (B // bt,)

    kernel = functools.partial(_att_block_kernel, activation=activation,
                               out_features=O, o_pad=OP, mxu_dtype=mxu_dtype)

    out_shapes = (
        jax.ShapeDtypeStruct((B, O, 1), dt),   # pooled, (O, 1) layout
        jax.ShapeDtypeStruct((B, O, T), dt),   # norm_att
        jax.ShapeDtypeStruct((B, O, T), dt),   # cla
    )

    # NOTE: the weight/bias blocks are grid-invariant; at production sizes
    # (O~527, C~2048) mark them pipeline_mode=pl.Buffered(1) to avoid the
    # redundant double buffer.  Left at the default here for jax-version
    # compatibility.  Similarly, padding T to a multiple of 128 (with masked
    # softmax/pooling) would make the norm_att/cla stores fully lane-dense.
    pooled, norm_att, cla = pl.pallas_call(
        kernel,
        out_shape=out_shapes,
        grid=grid,
        in_specs=[
            pl.BlockSpec((bt, C, T), lambda i: (i, 0, 0)),   # x (Bt per step)
            pl.BlockSpec((2 * OP, C), lambda i: (0, 0)),      # stacked weights
            pl.BlockSpec((2 * OP, 1), lambda i: (0, 0)),      # stacked biases
        ],
        out_specs=(
            pl.BlockSpec((bt, O, 1), lambda i: (i, 0, 0)),
            pl.BlockSpec((bt, O, T), lambda i: (i, 0, 0)),
            pl.BlockSpec((bt, O, T), lambda i: (i, 0, 0)),
        ),
        compiler_params=pltpu.CompilerParams(
            dimension_semantics=("parallel",),
            vmem_limit_bytes=_vmem_limit_bytes(bt, C, T, O, OP, itemsize)),
    )(x, w_stack, b_stack)

    return pooled.reshape(B, O), norm_att, cla


def _xavier_uniform_conv1d(key, out_ch, in_ch, ksize=1, dtype=jnp.float32):
    # PyTorch xavier_uniform_ for a Conv1d weight (out_ch, in_ch, ksize).
    fan_in = in_ch * ksize
    fan_out = out_ch * ksize
    bound = (6.0 / (fan_in + fan_out)) ** 0.5
    return jax.random.uniform(key, (out_ch, in_ch, ksize), dtype,
                              minval=-bound, maxval=bound)


def _reference(x, w_att, b_att, w_cla, b_cla, activation="linear"):
    # Pure-JAX reference replicating the PyTorch forward.
    att = jnp.einsum("oc,bct->bot", w_att, x) + b_att[None, :, None]
    norm_att = jax.nn.softmax(jnp.tanh(att), axis=-1)
    cla = jnp.einsum("oc,bct->bot", w_cla, x) + b_cla[None, :, None]
    if activation == "sigmoid":
        cla = jax.nn.sigmoid(cla)
    pooled = jnp.sum(norm_att * cla, axis=2)
    return pooled, norm_att, cla


if __name__ == "__main__":
    key = jax.random.PRNGKey(0)

    def make_params(k, c_in, c_out):
        k_wa, k_wc = jax.random.split(k)
        w_a = _xavier_uniform_conv1d(k_wa, c_out, c_in, 1)[:, :, 0]
        w_c = _xavier_uniform_conv1d(k_wc, c_out, c_in, 1)[:, :, 0]
        # init_weights(): xavier_uniform on weights, zero biases.
        return w_a, jnp.zeros((c_out,), jnp.float32), w_c, jnp.zeros((c_out,), jnp.float32)

    # --- config 1: AttBlockV2 default ('linear'), f32 MXU path ---------------
    B, C_IN, C_OUT, T = 2, 32, 8, 16
    k_x, k_p, key = jax.random.split(key, 3)
    x = jax.random.normal(k_x, (B, C_IN, T), jnp.float32)
    w_att, b_att, w_cla, b_cla = make_params(k_p, C_IN, C_OUT)

    pooled, natt, cla = att_block_v2(x, w_att, b_att, w_cla, b_cla, "linear")
    jax.block_until_ready((pooled, natt, cla))

    rp, rn, rc = _reference(x, w_att, b_att, w_cla, b_cla, "linear")
    assert pooled.shape == (B, C_OUT)
    assert natt.shape == (B, C_OUT, T)
    assert cla.shape == (B, C_OUT, T)
    # cla never touches the approximate reciprocal -> tight f32 tolerance;
    # norm_att / pooled use the EUP approx reciprocal -> slightly relaxed.
    assert jnp.allclose(cla, rc, atol=1e-5, rtol=1e-5)
    assert jnp.allclose(natt, rn, atol=1e-3, rtol=5e-3)
    assert jnp.allclose(pooled, rp, atol=1e-3, rtol=5e-3)

    # --- config 2: 'sigmoid', multi-batch block (Bt=4) + bf16 MXU inputs -----
    B2 = 8
    k_x2, k_p2, key = jax.random.split(key, 3)
    x2 = jax.random.normal(k_x2, (B2, C_IN, T), jnp.float32)
    w_att2, b_att2, w_cla2, b_cla2 = make_params(k_p2, C_IN, C_OUT)

    pooled2, natt2, cla2 = att_block_v2(x2, w_att2, b_att2, w_cla2, b_cla2,
                                        "sigmoid", mxu_dtype=jnp.bfloat16)
    jax.block_until_ready((pooled2, natt2, cla2))

    rp2, rn2, rc2 = _reference(x2, w_att2, b_att2, w_cla2, b_cla2, "sigmoid")
    assert pooled2.shape == (B2, C_OUT)
    assert jnp.allclose(cla2, rc2, atol=2e-2, rtol=2e-2)
    assert jnp.allclose(natt2, rn2, atol=2e-2, rtol=2e-2)
    assert jnp.allclose(pooled2, rp2, atol=2e-2, rtol=2e-2)

    print("KERNEL_OK")
</pallas_src>

<mosaic_0001>
module attributes {stable_mosaic.version = 11 : i64} {
  func.func @_att_block_kernel(%arg0: i32, %arg1: memref<1x32x16xf32, #tpu.memory_space<vmem>>, %arg2: memref<16x32xf32, #tpu.memory_space<vmem>>, %arg3: memref<16x1xf32, #tpu.memory_space<vmem>>, %arg4: memref<1x8x1xf32, #tpu.memory_space<vmem>>, %arg5: memref<1x8x16xf32, #tpu.memory_space<vmem>>, %arg6: memref<1x8x16xf32, #tpu.memory_space<vmem>>) attributes {dimension_semantics = [#tpu.dimension_semantics<parallel>], iteration_bounds = array<i64: 2>, scalar_prefetch = 0 : i64, scratch_operands = 0 : i64, tpu.core_type = #tpu.core_type<tc>, window_params = [{transform_indices = @transform_0, window_bounds = array<i64: 1, 32, 16>}, {pipeline_mode = #tpu.pipeline_mode<synchronous>, transform_indices = @transform_1, window_bounds = array<i64: 16, 32>}, {pipeline_mode = #tpu.pipeline_mode<synchronous>, transform_indices = @transform_2, window_bounds = array<i64: 16, 1>}, {transform_indices = @transform_3, window_bounds = array<i64: 1, 8, 1>}, {transform_indices = @transform_4, window_bounds = array<i64: 1, 8, 16>}, {transform_indices = @transform_5, window_bounds = array<i64: 1, 8, 16>}]} {
    %c0 = arith.constant 0 : index
    %c0_0 = arith.constant 0 : index
    %0 = vector.load %arg2[%c0, %c0_0] : memref<16x32xf32, #tpu.memory_space<vmem>>, vector<16x32xf32>
    %c0_1 = arith.constant 0 : index
    %c0_2 = arith.constant 0 : index
    %1 = vector.load %arg3[%c0_1, %c0_2] : memref<16x1xf32, #tpu.memory_space<vmem>>, vector<16x1xf32>
    %c0_3 = arith.constant 0 : index
    %c0_4 = arith.constant 0 : index
    %c0_5 = arith.constant 0 : index
    %2 = vector.load %arg1[%c0_3, %c0_4, %c0_5] : memref<1x32x16xf32, #tpu.memory_space<vmem>>, vector<1x32x16xf32>
    %3 = vector.shape_cast %2 : vector<1x32x16xf32> to vector<32x16xf32>
    %cst = arith.constant dense<0.000000e+00> : vector<16x16xf32>
    %4 = tpu.matmul %0, %3, %cst {dimension_numbers = #tpu.dot_dimension_numbers<[1], [0], [0], [1], [0, 0, 1, 1], [], []>} : vector<16x32xf32>, vector<32x16xf32>, vector<16x16xf32> -> vector<16x16xf32>
    %5 = vector.broadcast %1 : vector<16x1xf32> to vector<16x16xf32>
    %6 = arith.addf %4, %5 : vector<16x16xf32>
    %7 = vector.extract_strided_slice %6 {offsets = [0, 0], sizes = [8, 16], strides = [1, 1]} : vector<16x16xf32> to vector<8x16xf32>
    %8 = math.tanh %7 : vector<8x16xf32>
    %9 = vector.extract_strided_slice %6 {offsets = [8, 0], sizes = [8, 16], strides = [1, 1]} : vector<16x16xf32> to vector<8x16xf32>
    %cst_6 = arith.constant dense<0xFF800000> : vector<8xf32>
    %10 = vector.multi_reduction <maximumf>, %8, %cst_6 [1] : vector<8x16xf32> to vector<8xf32>
    %11 = vector.shape_cast %10 : vector<8xf32> to vector<8x1xf32>
    %12 = vector.broadcast %11 : vector<8x1xf32> to vector<8x16xf32>
    %13 = arith.subf %8, %12 : vector<8x16xf32>
    %14 = math.exp %13 : vector<8x16xf32>
    %cst_7 = arith.constant dense<0.000000e+00> : vector<8xf32>
    %15 = vector.multi_reduction <add>, %14, %cst_7 [1] : vector<8x16xf32> to vector<8xf32>
    %16 = vector.shape_cast %15 : vector<8xf32> to vector<8x1xf32>
    %17 = tpu.reciprocal %16 {approx = true} : vector<8x1xf32> -> vector<8x1xf32>
    %18 = vector.broadcast %17 : vector<8x1xf32> to vector<8x16xf32>
    %19 = arith.mulf %14, %18 : vector<8x16xf32>
    %20 = arith.mulf %19, %9 : vector<8x16xf32>
    %cst_8 = arith.constant dense<0.000000e+00> : vector<8xf32>
    %21 = vector.multi_reduction <add>, %20, %cst_8 [1] : vector<8x16xf32> to vector<8xf32>
    %22 = vector.shape_cast %21 : vector<8xf32> to vector<8x1xf32>
    %c0_9 = arith.constant 0 : index
    %c0_10 = arith.constant 0 : index
    %c0_11 = arith.constant 0 : index
    %23 = vector.load %arg5[%c0_9, %c0_10, %c0_11] : memref<1x8x16xf32, #tpu.memory_space<vmem>>, vector<1x8x16xf32>
    %24 = vector.shape_cast %23 : vector<1x8x16xf32> to vector<8x16xf32>
    %25 = vector.shape_cast %19 : vector<8x16xf32> to vector<1x8x16xf32>
    tpu.vector_store %arg5[%c0_9, %c0_10, %c0_11], %25 {strides = array<i32>} : memref<1x8x16xf32, #tpu.memory_space<vmem>>, vector<1x8x16xf32>,
    %c0_12 = arith.constant 0 : index
    %c0_13 = arith.constant 0 : index
    %c0_14 = arith.constant 0 : index
    %26 = vector.load %arg6[%c0_12, %c0_13, %c0_14] : memref<1x8x16xf32, #tpu.memory_space<vmem>>, vector<1x8x16xf32>
    %27 = vector.shape_cast %26 : vector<1x8x16xf32> to vector<8x16xf32>
    %28 = vector.shape_cast %9 : vector<8x16xf32> to vector<1x8x16xf32>
    tpu.vector_store %arg6[%c0_12, %c0_13, %c0_14], %28 {strides = array<i32>} : memref<1x8x16xf32, #tpu.memory_space<vmem>>, vector<1x8x16xf32>,
    %c0_15 = arith.constant 0 : index
    %c0_16 = arith.constant 0 : index
    %c0_17 = arith.constant 0 : index
    %29 = vector.load %arg4[%c0_15, %c0_16, %c0_17] : memref<1x8x1xf32, #tpu.memory_space<vmem>>, vector<1x8x1xf32>
    %30 = vector.shape_cast %29 : vector<1x8x1xf32> to vector<8x1xf32>
    %31 = vector.shape_cast %22 : vector<8x1xf32> to vector<1x8x1xf32>
    tpu.vector_store %arg4[%c0_15, %c0_16, %c0_17], %31 {strides = array<i32>} : memref<1x8x1xf32, #tpu.memory_space<vmem>>, vector<1x8x1xf32>,
    return
  }
  func.func @transform_0(%arg0: i32) -> (i32, i32, i32) {
    %c0_i32 = arith.constant 0 : i32
    %c0_i32_0 = arith.constant 0 : i32
    %c0_i32_1 = arith.constant 0 : i32
    return %arg0, %c0_i32, %c0_i32_0 : i32, i32, i32
  }
  func.func @transform_1(%arg0: i32) -> (i32, i32) {
    %c0_i32 = arith.constant 0 : i32
    %c0_i32_0 = arith.constant 0 : i32
    %c0_i32_1 = arith.constant 0 : i32
    return %c0_i32, %c0_i32_0 : i32, i32
  }
  func.func @transform_2(%arg0: i32) -> (i32, i32) {
    %c0_i32 = arith.constant 0 : i32
    %c0_i32_0 = arith.constant 0 : i32
    %c0_i32_1 = arith.constant 0 : i32
    return %c0_i32, %c0_i32_0 : i32, i32
  }
  func.func @transform_3(%arg0: i32) -> (i32, i32, i32) {
    %c0_i32 = arith.constant 0 : i32
    %c0_i32_0 = arith.constant 0 : i32
    %c0_i32_1 = arith.constant 0 : i32
    return %arg0, %c0_i32, %c0_i32_0 : i32, i32, i32
  }
  func.func @transform_4(%arg0: i32) -> (i32, i32, i32) {
    %c0_i32 = arith.constant 0 : i32
    %c0_i32_0 = arith.constant 0 : i32
    %c0_i32_1 = arith.constant 0 : i32
    return %arg0, %c0_i32, %c0_i32_0 : i32, i32, i32
  }
  func.func @transform_5(%arg0: i32) -> (i32, i32, i32) {
    %c0_i32 = arith.constant 0 : i32
    %c0_i32_0 = arith.constant 0 : i32
    %c0_i32_1 = arith.constant 0 : i32
    return %arg0, %c0_i32, %c0_i32_0 : i32, i32, i32
  }
}

</mosaic_0001>

<llo_original>
// kernel: tpu_custom_call.1
$region0: #{tpu_custom_call.1}
  #allocation0 [shape = 'u32[]', space=smem, size = 0x4, offset = 0x4, fixed_abs, tag = 'smem constant byte address 0x4 - core index']
  #allocation1 [shape = 'u32[144,128]{1,0:T(1,128)}', space=vmem, size = 0x12000, scoped, tag = 'internal scratch']
  %s0 = inlined_call_operand.vmem [shape: f32[2,32,16], index: 0, kind: input, shape index: {}]
  %s1 = inlined_call_operand.vmem [shape: f32[16,32], index: 1, kind: input, shape index: {}]
  %s2 = inlined_call_operand.vmem [shape: f32[16,1], index: 2, kind: input, shape index: {}]
  %s3 = inlined_call_operand.vmem [shape: f32[2,8,1], index: 3, kind: output, shape index: {0}]
  %s4 = inlined_call_operand.hbm [shape: f32[2,8,16], index: 4, kind: output, shape index: {1}]
  %s5 = inlined_call_operand.hbm [shape: f32[2,8,16], index: 5, kind: output, shape index: {2}]
  %6 = xla_tuple %s3, %s4, %s5
  %s7 = sld [smem:[#allocation0]]
  $region61: #{tpu_custom_call.1} parent=0
    _
  %s9 = ssub.s32 1, %s7
  %s10 = scalar_select 0, %s9, %s7
  $region1: #{tpu_custom_call.1} parent=0
    #allocation2 [shape = 'u8[8192]{0}', space=vmem, size = 0x2000, scoped, tag = 'output window, operand 1']
    #allocation3 [shape = 's32[2]{0}', space=sflag, size = 0x8, scoped, tag = 'scoped memory for tpu_custom_call.1']
    #allocation4 [shape = 'u8[8192]{0}', space=vmem, size = 0x2000, scoped, tag = 'output window, operand 2']
    #allocation5 [shape = 's32[2]{0}', space=sflag, size = 0x8, scoped, tag = 'scoped memory for tpu_custom_call.1']
    %11 = vsyncpa [#allocation3], 0
    %s12 = scalar_lea.sflag [#allocation3], 1
    %13 = vsyncpa %s12, 0
    %14 = vsyncpa [#allocation5], 0
    %s15 = scalar_lea.sflag [#allocation5], 1
    %16 = vsyncpa %s15, 0
    loop: start=0, step=1, limit=4
    $region2: #{tpu_custom_call.1} parent=1 // loop_pre_header
      _
    $region3: #{tpu_custom_call.1} parent=1 // loop_header
      %s18 = sphi 0, %s22
      %p19 = scmp.ge.s32.totalorder %s18, 4
      %s28 = sphi 0, %s30
      %s31 = sphi 0, %s28
      %s32 = sphi 0, %s31
      %s48 = sphi 0, %s32
      %s52 = sphi 0, %s52
      %s54 = sphi 0, %s52
      %s55 = sphi 0, %s54
      %s69 = sphi 0, %s55
      %s73 = sphi 0, %s73
      %s75 = sphi 0, %s73
      %s76 = sphi 0, %s75
      %s90 = sphi 0, %s76
      %s96 = sphi 0, %s98
      %s99 = sphi 0, %s96
      %s100 = sphi 0, %s99
      %s116 = sphi 0, %s100
      %s122 = sphi 0, %s124
      %s125 = sphi 0, %s122
      %s126 = sphi 0, %s125
      %s142 = sphi 0, %s126
      %s148 = sphi 0, %s150
      %s151 = sphi 0, %s148
      %s152 = sphi 0, %s151
      %s168 = sphi 0, %s152
    $region4: #{tpu_custom_call.1} parent=1 // loop_header_branch
      %21 = sbr.rel (%p19) target = $region8
    $region5: #{tpu_custom_call.1} parent=1 // loop_body
      %s23 = ssub.s32 %s18, 1
      %s24 = ssub.s32 %s18, 2
      %s25 = sadd.s32 %s18, 1
      %s26 = ssub.s32 %s18, %s25
      %p27 = scmp.eq.s32.totalorder %s26, 0
      %s29 = sadd.s32 %s28, 1
      %s30 = scalar_select %p27, %s28, %s29
      %p33 = pneg %p27
      %p34 = scmp.eq.s32.totalorder %s18, 1
      %p35 = por %p33, %p34
      %p36 = scmp.ne.s32.totalorder %s28, %s31
      %p37 = scmp.eq.s32.totalorder %s18, 0
      %p38 = por %p36, %p37
      %p39 = scmp.ne.s32.totalorder %s28, %s31
      %p40 = scmp.eq.s32.totalorder %s23, 1
      %p41 = por %p39, %p40
      %p42 = scmp.ne.s32.totalorder %s31, %s32
      %p43 = scmp.eq.s32.totalorder %s23, 0
      %p44 = por %p42, %p43
      %p45 = scmp.ne.s32.totalorder %s31, %s32
      %p46 = scmp.eq.s32.totalorder %s24, 1
      %p47 = por %p45, %p46
      %p49 = scmp.ne.s32.totalorder %s32, %s48
      %p50 = scmp.eq.s32.totalorder %s24, 0
      %p51 = por %p49, %p50
      %s53 = sadd.s32 %s52, 1
      %p56 = scmp.eq.s32.totalorder %s18, 1
      %p57 = scmp.ne.s32.totalorder %s52, %s54
      %p58 = scmp.eq.s32.totalorder %s18, 0
      %p59 = por %p57, %p58
      %p60 = scmp.ne.s32.totalorder %s52, %s54
      %p61 = scmp.eq.s32.totalorder %s23, 1
      %p62 = por %p60, %p61
      %p63 = scmp.ne.s32.totalorder %s54, %s55
      %p64 = scmp.eq.s32.totalorder %s23, 0
      %p65 = por %p63, %p64
      %p66 = scmp.ne.s32.totalorder %s54, %s55
      %p67 = scmp.eq.s32.totalorder %s24, 1
      %p68 = por %p66, %p67
      %p70 = scmp.ne.s32.totalorder %s55, %s69
      %p71 = scmp.eq.s32.totalorder %s24, 0
      %p72 = por %p70, %p71
      %s74 = sadd.s32 %s73, 1
      %p77 = scmp.eq.s32.totalorder %s18, 1
      %p78 = scmp.ne.s32.totalorder %s73, %s75
      %p79 = scmp.eq.s32.totalorder %s18, 0
      %p80 = por %p78, %p79
      %p81 = scmp.ne.s32.totalorder %s73, %s75
      %p82 = scmp.eq.s32.totalorder %s23, 1
      %p83 = por %p81, %p82
      %p84 = scmp.ne.s32.totalorder %s75, %s76
      %p85 = scmp.eq.s32.totalorder %s23, 0
      %p86 = por %p84, %p85
      %p87 = scmp.ne.s32.totalorder %s75, %s76
      %p88 = scmp.eq.s32.totalorder %s24, 1
      %p89 = por %p87, %p88
      %p91 = scmp.ne.s32.totalorder %s76, %s90
      %p92 = scmp.eq.s32.totalorder %s24, 0
      %p93 = por %p91, %p92
      %s94 = ssub.s32 %s18, %s25
      %p95 = scmp.eq.s32.totalorder %s94, 0
      %s97 = sadd.s32 %s96, 1
      %s98 = scalar_select %p95, %s96, %s97
      %p101 = pneg %p95
      %p102 = scmp.eq.s32.totalorder %s18, 1
      %p103 = por %p101, %p102
      %p104 = scmp.ne.s32.totalorder %s96, %s99
      %p105 = scmp.eq.s32.totalorder %s18, 0
      %p106 = por %p104, %p105
      %p107 = scmp.ne.s32.totalorder %s96, %s99
      %p108 = scmp.eq.s32.totalorder %s23, 1
      %p109 = por %p107, %p108
      %p110 = scmp.ne.s32.totalorder %s99, %s100
      %p111 = scmp.eq.s32.totalorder %s23, 0
      %p112 = por %p110, %p111
      %p113 = scmp.ne.s32.totalorder %s99, %s100
      %p114 = scmp.eq.s32.totalorder %s24, 1
      %p115 = por %p113, %p114
      %p117 = scmp.ne.s32.totalorder %s100, %s116
      %p118 = scmp.eq.s32.totalorder %s24, 0
      %p119 = por %p117, %p118
      %s120 = ssub.s32 %s18, %s25
      %p121 = scmp.eq.s32.totalorder %s120, 0
      %s123 = sadd.s32 %s122, 1
      %s124 = scalar_select %p121, %s122, %s123
      %p127 = pneg %p121
      %p128 = scmp.eq.s32.totalorder %s18, 1
      %p129 = por %p127, %p128
      %p130 = scmp.ne.s32.totalorder %s122, %s125
      %p131 = scmp.eq.s32.totalorder %s18, 0
      %p132 = por %p130, %p131
      %p133 = scmp.ne.s32.totalorder %s122, %s125
      %p134 = scmp.eq.s32.totalorder %s23, 1
      %p135 = por %p133, %p134
      %p136 = scmp.ne.s32.totalorder %s125, %s126
      %p137 = scmp.eq.s32.totalorder %s23, 0
      %p138 = por %p136, %p137
      %p139 = scmp.ne.s32.totalorder %s125, %s126
      %p140 = scmp.eq.s32.totalorder %s24, 1
      %p141 = por %p139, %p140
      %p143 = scmp.ne.s32.totalorder %s126, %s142
      %p144 = scmp.eq.s32.totalorder %s24, 0
      %p145 = por %p143, %p144
      %s146 = ssub.s32 %s18, %s25
      %p147 = scmp.eq.s32.totalorder %s146, 0
      %s149 = sadd.s32 %s148, 1
      %s150 = scalar_select %p147, %s148, %s149
      %p153 = pneg %p147
      %p154 = scmp.eq.s32.totalorder %s18, 1
      %p155 = por %p153, %p154
      %p156 = scmp.ne.s32.totalorder %s148, %s151
      %p157 = scmp.eq.s32.totalorder %s18, 0
      %p158 = por %p156, %p157
      %p159 = scmp.ne.s32.totalorder %s148, %s151
      %p160 = scmp.eq.s32.totalorder %s23, 1
      %p161 = por %p159, %p160
      %p162 = scmp.ne.s32.totalorder %s151, %s152
      %p163 = scmp.eq.s32.totalorder %s23, 0
      %p164 = por %p162, %p163
      %p165 = scmp.ne.s32.totalorder %s151, %s152
      %p166 = scmp.eq.s32.totalorder %s24, 1
      %p167 = por %p165, %p166
      %p169 = scmp.ne.s32.totalorder %s152, %s168
      %p170 = scmp.eq.s32.totalorder %s24, 0
      %p171 = por %p169, %p170
      %p172 = scmp.le.s32.totalorder 1, %s18
      %p173 = scmp.lt.s32.totalorder %s18, 3
      %p174 = pnand %p172, %p173
      %p175 = pneg %p174
      // Predicated region
      $region9: #{tpu_custom_call.1} parent=5 // pred_check
        _
      $region10: #{tpu_custom_call.1} parent=5 // pred_check_branch
        %177 = sbr.rel (%p174) target = $region12
      $region11: #{tpu_custom_call.1} parent=5 // pred_region
        %s178 = ssub.s32 %s18, 1
        // Predicated region
        $region13: #{tpu_custom_call.1} parent=11 // pred_check
          %p179 = pneg %p65
        $region14: #{tpu_custom_call.1} parent=11 // pred_check_branch
          %181 = sbr.rel (%p179) target = $region16
        $region15: #{tpu_custom_call.1} parent=11 // pred_region
          _
        $region16: #{tpu_custom_call.1} parent=11 // pred_fallthru
          _
        // Predicated region
        $region17: #{tpu_custom_call.1} parent=11 // pred_check
          %p182 = pneg %p86
        $region18: #{tpu_custom_call.1} parent=11 // pred_check_branch
          %184 = sbr.rel (%p182) target = $region20
        $region19: #{tpu_custom_call.1} parent=11 // pred_region
          _
        $region20: #{tpu_custom_call.1} parent=11 // pred_fallthru
          _
      $region12: #{tpu_custom_call.1} parent=5 // pred_fallthru
        _
      %p185 = scmp.lt.s32.totalorder %s18, 2
      // Predicated region
      $region21: #{tpu_custom_call.1} parent=5 // pred_check
        %p186 = pneg %p185
      $region22: #{tpu_custom_call.1} parent=5 // pred_check_branch
        %188 = sbr.rel (%p186) target = $region24
      $region23: #{tpu_custom_call.1} parent=5 // pred_region
        // Predicated region
        $region25: #{tpu_custom_call.1} parent=23 // pred_check
          %p189 = pneg %p38
        $region26: #{tpu_custom_call.1} parent=23 // pred_check_branch
          %191 = sbr.rel (%p189) target = $region28
        $region27: #{tpu_custom_call.1} parent=23 // pred_region
          %p192 = scmp.lt.s32.totalorder %s18, 1
          %s193 = scalar_select %p192, %s18, 1
          %s194 = smul.addr %s193, 4
          %s195 = smul.addr %s194, 8
          %s196 = scalar_lea.vmem %s0, %s195
        $region28: #{tpu_custom_call.1} parent=23 // pred_fallthru
          _
      $region24: #{tpu_custom_call.1} parent=5 // pred_fallthru
        _
      %p197 = scmp.le.s32.totalorder 1, %s18
      %p198 = scmp.lt.s32.totalorder %s18, 3
      %p199 = pnand %p197, %p198
      %p200 = pneg %p199
      // Predicated region
      $region29: #{tpu_custom_call.1} parent=5 // pred_check
        _
      $region30: #{tpu_custom_call.1} parent=5 // pred_check_branch
        %202 = sbr.rel (%p199) target = $region32
      $region31: #{tpu_custom_call.1} parent=5 // pred_region
        %s203 = ssub.s32 %s18, 1
        %p204 = scmp.lt.s32.totalorder %s23, 1
        %s205 = scalar_select %p204, %s23, 1
        %s206 = smul.addr %s205, 4
        %s207 = smul.addr %s206, 8
        %s208 = scalar_lea.vmem %s0, %s207
        %p209 = pneg %p44
        %p210 = pneg %p41
        %p211 = pneg %p65
        %p212 = pneg %p62
        %p213 = pneg %p86
        %p214 = pneg %p83
        %p215 = pneg %p112
        %p216 = pneg %p109
        %p217 = scmp.lt.s32.totalorder %s23, 1
        %s218 = scalar_select %p217, %s23, 1
        %s219 = smul.addr %s218, 8
        %s220 = scalar_lea.vmem %s3, %s219
        %p221 = pneg %p138
        %p222 = pneg %p135
        %s223 = sand.u32 %s125, 1
        %s224 = scalar_lea.sflag [#allocation3], %s223
        %s225 = sand.u32 %s125, 1
        %s226 = smul.addr %s225, 8
        %s227 = scalar_lea.vmem [#allocation2], %s226
        %p228 = pneg %p164
        %p229 = pneg %p161
        %s230 = sand.u32 %s151, 1
        %s231 = scalar_lea.sflag [#allocation5], %s230
        %s232 = sand.u32 %s151, 1
        %s233 = smul.addr %s232, 8
        %s234 = scalar_lea.vmem [#allocation4], %s233
        %p235 = scmp.lt.s32.totalorder %s23, 1
        %s236 = scalar_select %p235, %s23, 1
        %s237 = smul.addr %s236, 4
        %s238 = smul.addr %s237, 8
        %s239 = scalar_lea.vmem %s0, %s238
        %p240 = scmp.lt.s32.totalorder %s23, 1
        %s241 = scalar_select %p240, %s23, 1
        %s242 = smul.addr %s241, 8
        %s243 = scalar_lea.vmem %s3, %s242
        %v244 = vld [vmem:[%s1] sm:$0xff]
        %v245 = vld [vmem:[%s1 + $0x8] sm:$0xff]
        %v246 = vld [vmem:[%s2] sm:$0xff]
        %v247 = vld [vmem:[%s2 + $0x8] sm:$0xff]
        %v248 = vld [vmem:[%s239] sm:$0xff]
        %v249 = vld [vmem:[%s239 + $0x8] sm:$0xff]
        %v250 = vld [vmem:[%s239 + $0x10] sm:$0xff]
        %v251 = vld [vmem:[%s239 + $0x18] sm:$0xff]
        %253 = vset.pattern.permute.xlu0 0
        %254 = vperm.xlu0 %253, %v246
        %v255 = vpop.permute.xlu0 %254
        %258 = vset.pattern.permute.xlu0 0
        %259 = vperm.xlu0 %258, %v247
        %v260 = vpop.permute.xlu0 %259
        %vm262 = vcmask 261120
        %v264 = vsel %vm262, %v244, 0
        %v267 = vsel %vm262, %v245, 0
        %269 = vmatprep.subr.mxu0 0.0
        %270 = vmatpush1.msra.mxu0 %v248
        %271 = vmatprep.subr.mxu0 0.0
        %272 = vmatpush1.msra.mxu0 %v249
        %273 = vmatprep.subr.mxu0 0.0
        %274 = vmatpush1.msra.mxu0 %v250
        %275 = vmatprep.subr.mxu0 0.0
        %276 = vmatpush1.msra.mxu0 %v251
        %277 = vmatprep.subr.mxu0 0.0
        %278 = vmatpush1.msra.mxu0 0.0
        %279 = vmatprep.subr.mxu0 0.0
        %280 = vmatpush1.msra.mxu0 0.0
        %281 = vmatprep.subr.mxu0 0.0
        %282 = vmatpush1.msra.mxu0 0.0
        %283 = vmatprep.subr.mxu0 0.0
        %284 = vmatpush1.msra.mxu0 0.0
        %285 = vmatprep.subr.mxu0 0.0
        %286 = vmatpush1.msra.mxu0 0.0
        %287 = vmatprep.subr.mxu0 0.0
        %288 = vmatpush1.msra.mxu0 0.0
        %289 = vmatprep.subr.mxu0 0.0
        %290 = vmatpush1.msra.mxu0 0.0
        %291 = vmatprep.subr.mxu0 0.0
        %292 = vmatpush1.msra.mxu0 0.0
        %293 = vmatprep.subr.mxu0 0.0
        %294 = vmatpush1.msra.mxu0 0.0
        %295 = vmatprep.subr.mxu0 0.0
        %296 = vmatpush1.msra.mxu0 0.0
        %297 = vmatprep.subr.mxu0 0.0
        %298 = vmatpush1.msra.mxu0 0.0
        %299 = vmatprep.subr.mxu0 0.0
        %300 = vmatpush1.msra.mxu0 0.0
        %301 = vmatprep.subr.mxu0 0.0
        %302 = vmatpush1.msra.mxu0 0.0
        %303 = vmatprep.subr.mxu0 0.0
        %304 = vmatpush1.msra.mxu0 0.0
        %305 = vmatprep.subr.mxu0 0.0
        %306 = vmatpush1.msra.mxu0 0.0
        %307 = vmatprep.subr.mxu0 0.0
        %308 = vmatpush1.msra.mxu0 0.0
        %309 = vmatprep.subr.mxu0 0.0
        %310 = vmatpush1.msra.mxu0 0.0
        %311 = vmatprep.subr.mxu0 0.0
        %312 = vmatpush1.msra.mxu0 0.0
        %313 = vmatprep.subr.mxu0 0.0
        %314 = vmatpush1.msra.mxu0 0.0
        %315 = vmatprep.subr.mxu0 0.0
        %316 = vmatpush1.msra.mxu0 0.0
        %317 = vmatprep.subr.mxu0 0.0
        %318 = vmatpush1.msra.mxu0 0.0
        %319 = vmatprep.subr.mxu0 0.0
        %320 = vmatpush1.msra.mxu0 0.0
        %321 = vmatprep.subr.mxu0 0.0
        %322 = vmatpush1.msra.mxu0 0.0
        %323 = vmatprep.subr.mxu0 0.0
        %324 = vmatpush1.msra.mxu0 0.0
        %325 = vmatprep.subr.mxu0 0.0
        %326 = vmatpush1.msra.mxu0 0.0
        %327 = vmatprep.subr.mxu0 0.0
        %328 = vmatpush1.msra.mxu0 0.0
        %329 = vmatprep.subr.mxu0 0.0
        %330 = vmatpush1.msra.mxu0 0.0
        %331 = vmatprep.subr.mxu0 0.0
        %332 = vmatpush1.msra.mxu0 0.0
        %333 = vmatprep.mubr.f32.mxu0 0.0
        %334 = vmatmul.mubr.f32.gmra.mrb[0].mxu0 %v264
        %v335 = vpop.f32.mrb[0].mxu0
        %v336 = vadd.f32 %v255, %v335
        %v337 = vpop.f32.mrb[0].mxu0
        %338 = vmatprep.mubr.f32.mxu0 0.0
        %339 = vmatmul.mubr.f32.gmra.mrb[0].mxu0 %v267
        %v340 = vpop.f32.mrb[0].mxu0
        %v341 = vadd.f32 %v260, %v340
        %v342 = vpop.f32.mrb[0].mxu0
        %343 = vdwg.mxu0
        %v344 = vtanh.pop %v336
        %vm345 = vcmask 130048
        %v346 = vsel %vm345, %v344, -inf
        %347 = vmax.xlane.f32.xlu0 %v346
        %v348 = vpop.xlane.xlu0 %347
        %v349 = vsub.f32 %v344, %v348
        %v350 = vmul.f32 %v349, 1.442695
        %v351 = vpow.pop %v350
        %v352 = vsel %vm345, %v351, 0.0
        %353 = vadd.xlane.f32.xlu0 %v352
        %v354 = vpop.xlane.xlu0 %353
        %v355 = vrcp.pop %v354
        %v356 = vmul.f32 %v351, %v355
        %v357 = vmul.f32 %v356, %v341
        %v358 = vsel %vm345, %v357, 0.0
        %359 = vadd.xlane.f32.xlu0 %v358
        %v360 = vpop.xlane.xlu0 %359
        %361 = vst.msk [vmem:[%s227] sm:$0xff] %vm345, %v356
        %362 = vst.msk [vmem:[%s234] sm:$0xff] %vm345, %v341
        %vm363 = vcmask 7168
        %364 = vst.msk [vmem:[%s243] sm:$0xff] %vm363, %v360
        %p365 = scmp.lt.s32.totalorder %s23, 1
        %s366 = scalar_select %p365, %s23, 1
        %s367 = smul.addr %s366, 8
        %s368 = scalar_lea.vmem %s3, %s367
        %s369 = sand.u32 %s125, 1
        %s370 = scalar_lea.sflag [#allocation3], %s369
        %s371 = sand.u32 %s125, 1
        %s372 = smul.addr %s371, 8
        %s373 = scalar_lea.vmem [#allocation2], %s372
        %s374 = sand.u32 %s151, 1
        %s375 = scalar_lea.sflag [#allocation5], %s374
        %s376 = sand.u32 %s151, 1
        %s377 = smul.addr %s376, 8
        %s378 = scalar_lea.vmem [#allocation4], %s377
        // Predicated region
        $region33: #{tpu_custom_call.1} parent=31 // pred_check
          %p379 = pneg %p109
        $region34: #{tpu_custom_call.1} parent=31 // pred_check_branch
          %381 = sbr.rel (%p379) target = $region36
        $region35: #{tpu_custom_call.1} parent=31 // pred_region
          _
        $region36: #{tpu_custom_call.1} parent=31 // pred_fallthru
          _
        // Predicated region
        $region37: #{tpu_custom_call.1} parent=31 // pred_check
          %p382 = pneg %p135
        $region38: #{tpu_custom_call.1} parent=31 // pred_check_branch
          %384 = sbr.rel (%p382) target = $region40
        $region39: #{tpu_custom_call.1} parent=31 // pred_region
          %s386 = ssub.s32 128, 128
          %387 = vsyncadd %s370, %s386
          %s388 = smul.addr %s23, 128
          %s389 = scalar_lea.hbm %s4, %s388
          %s391 = sshll.u32 %s373, 4
          %s392 = int_to_ptr.vmem [resolvable:$true] %s391
          %394 = dma.vmem_to_hbm [thread:$0]  %s392, 128, %s389, %s370
        $region40: #{tpu_custom_call.1} parent=31 // pred_fallthru
          _
        // Predicated region
        $region41: #{tpu_custom_call.1} parent=31 // pred_check
          %p395 = pneg %p161
        $region42: #{tpu_custom_call.1} parent=31 // pred_check_branch
          %397 = sbr.rel (%p395) target = $region44
        $region43: #{tpu_custom_call.1} parent=31 // pred_region
          %s399 = ssub.s32 128, 128
          %400 = vsyncadd %s375, %s399
          %s401 = smul.addr %s23, 128
          %s402 = scalar_lea.hbm %s5, %s401
          %s404 = sshll.u32 %s378, 4
          %s405 = int_to_ptr.vmem [resolvable:$true] %s404
          %407 = dma.vmem_to_hbm [thread:$0]  %s405, 128, %s402, %s375
        $region44: #{tpu_custom_call.1} parent=31 // pred_fallthru
          _
      $region32: #{tpu_custom_call.1} parent=5 // pred_fallthru
        _
      %p408 = scmp.le.s32.totalorder 2, %s18
      // Predicated region
      $region45: #{tpu_custom_call.1} parent=5 // pred_check
        %p409 = pneg %p408
      $region46: #{tpu_custom_call.1} parent=5 // pred_check_branch
        %411 = sbr.rel (%p409) target = $region48
      $region47: #{tpu_custom_call.1} parent=5 // pred_region
        %s412 = ssub.s32 %s18, 2
        // Predicated region
        $region49: #{tpu_custom_call.1} parent=47 // pred_check
          %p413 = pneg %p115
        $region50: #{tpu_custom_call.1} parent=47 // pred_check_branch
          %415 = sbr.rel (%p413) target = $region52
        $region51: #{tpu_custom_call.1} parent=47 // pred_region
          %p416 = scmp.lt.s32.totalorder %s24, 1
          %s417 = scalar_select %p416, %s24, 1
          %s418 = smul.addr %s417, 8
          %s419 = scalar_lea.vmem %s3, %s418
        $region52: #{tpu_custom_call.1} parent=47 // pred_fallthru
          _
        // Predicated region
        $region53: #{tpu_custom_call.1} parent=47 // pred_check
          %p420 = pneg %p141
        $region54: #{tpu_custom_call.1} parent=47 // pred_check_branch
          %422 = sbr.rel (%p420) target = $region56
        $region55: #{tpu_custom_call.1} parent=47 // pred_region
          %s423 = sand.u32 %s126, 1
          %s424 = scalar_lea.sflag [#allocation3], %s423
          %s425 = sand.u32 %s126, 1
          %s426 = smul.addr %s425, 8
          %s427 = scalar_lea.vmem [#allocation2], %s426
          %428 = dma.done %s424, 128
        $region56: #{tpu_custom_call.1} parent=47 // pred_fallthru
          _
        // Predicated region
        $region57: #{tpu_custom_call.1} parent=47 // pred_check
          %p429 = pneg %p167
        $region58: #{tpu_custom_call.1} parent=47 // pred_check_branch
          %431 = sbr.rel (%p429) target = $region60
        $region59: #{tpu_custom_call.1} parent=47 // pred_region
          %s432 = sand.u32 %s152, 1
          %s433 = scalar_lea.sflag [#allocation5], %s432
          %s434 = sand.u32 %s152, 1
          %s435 = smul.addr %s434, 8
          %s436 = scalar_lea.vmem [#allocation4], %s435
          %437 = dma.done %s433, 128
        $region60: #{tpu_custom_call.1} parent=47 // pred_fallthru
          _
      $region48: #{tpu_custom_call.1} parent=5 // pred_fallthru
        _
    $region6: #{tpu_custom_call.1} parent=1 // loop_footer
      %s22 = sadd.s32 1, %s18
    $region7: #{tpu_custom_call.1} parent=1 // loop_footer_branch
      %17 = sbr.rel target = $region3
    $region8: #{tpu_custom_call.1} parent=1 // loop_exit
      _
    %438 = vsyncpa [#allocation3], 1
    %s439 = scalar_lea.sflag [#allocation3], 1
    %440 = vsyncpa %s439, 1
    %441 = vsyncpa [#allocation5], 1
    %s442 = scalar_lea.sflag [#allocation5], 1
    %443 = vsyncpa %s442, 1

</llo_original>
